<compile_context>
chip_gen: v5e
topology: v5e:2x2
jax: 0.10.0
libtpu: 0.0.40
codegen_flags: <defaults>
</compile_context>

<pallas_src>
import numpy as np
import jax
import jax.numpy as jnp
from jax import lax
from jax.experimental import pallas as pl
from jax.experimental.pallas import tpu as pltpu

NEG_SLOPE = 0.1  # nn.LeakyReLU(negative_slope=0.1)


# ----------------------------- fused kernel -----------------------------

def _make_trunk_kernel(b_tile, meta):
    H1, W1C1 = meta["H1"], meta["W1"] * meta["C1"]
    H2, W2C2 = meta["H2"], meta["W2"] * meta["C2"]
    H3 = meta["H3"]

    def conv_gemm(src_ref, Ho, b_mat_ref, bias_ref):
        # src_ref: (b_tile, Hi+2, Wi*Cin) with zero pad rows at 0 and Hi+1.
        # Fetch the three stride-2 row taps with strided loads, lay them side by side along
        # lanes (kh slowest within K), flatten images onto rows -> ONE MXU GEMM + VPU epilogue.
        k_in = src_ref.shape[-1]
        taps = [src_ref[:, pl.ds(kh, Ho, stride=2), :] for kh in range(3)]   # 3 x (b, Ho, K)
        lhs = jnp.concatenate(taps, axis=-1).reshape(b_tile * Ho, 3 * k_in)
        y = jnp.dot(lhs, b_mat_ref[...], preferred_element_type=jnp.float32)
        y = y + bias_ref[...]
        return jnp.where(y >= 0, y, NEG_SLOPE * y)                           # (b*Ho, Wo*Cout)

    def stash(dst_ref, val, Ho, wc):
        # interior rows <- activation; pad rows re-zeroed every step (cheap) so the kernel has
        # no cross-grid-step scratch state -- safe under megacore grid sharding.
        dst_ref[:, 0:1, :] = jnp.zeros((b_tile, 1, wc), jnp.float32)
        dst_ref[:, Ho + 1:Ho + 2, :] = jnp.zeros((b_tile, 1, wc), jnp.float32)
        for b in range(b_tile):
            dst_ref[b, 1:Ho + 1, :] = val[b * Ho:(b + 1) * Ho, :]

    def kernel(x_ref, b1_ref, c1_ref, b2_ref, c2_ref, b3_ref, c3_ref,
               pool_ref, fold_ref, o_ref, h1_pad, h2_pad):
        h1 = conv_gemm(x_ref, H1, b1_ref, c1_ref)            # (b*H1, W1*C1)
        stash(h1_pad, h1, H1, W1C1)
        h2 = conv_gemm(h1_pad, H2, b2_ref, c2_ref)           # (b*H2, W2*C2)
        stash(h2_pad, h2, H2, W2C2)
        h3 = conv_gemm(h2_pad, H3, b3_ref, c3_ref)           # (b*H3, W3*nf)

        # fused global spatial mean: per-image 0/1 row-sum (rows first), then the pre-scaled
        # lane-fold matmul.
        pooled = jnp.dot(pool_ref[...], h3, preferred_element_type=jnp.float32)
        pooled = jnp.dot(pooled, fold_ref[...], preferred_element_type=jnp.float32)
        o_ref[0] = pooled.astype(o_ref.dtype)                # o_ref block: (1, b_tile, nf)

    return kernel


# ----------------- one-time weight repacking (hoisted, host-side) -----------------

def _grouped_to_full(w_grp, groups):
    """(Cout, Cin//g, 3, 3) grouped weight -> equivalent block-diagonal dense weight."""
    w = np.asarray(w_grp, np.float32)
    cout, cin_g = w.shape[0], w.shape[1]
    opg = cout // groups
    full = np.zeros((cout, cin_g * groups, w.shape[2], w.shape[3]), np.float32)
    for g in range(groups):
        full[g * opg:(g + 1) * opg, g * cin_g:(g + 1) * cin_g] = w[g * opg:(g + 1) * opg]
    return full


def _conv_constants(w_dense, bias, Hi, Wi):
    """Lower one 3x3 / stride-2 / pad-1 conv on (H, W*C)-laid-out activations to:
       B: (3*Wi*Cin, Wo*Cout) with kh slowest in K (row padding lives in the data),
       bias_row: (1, Wo*Cout)."""
    w = np.asarray(w_dense, np.float32)                       # (Cout, Cin, 3, 3)
    cout, cin = w.shape[0], w.shape[1]
    Ho = (Hi - 1) // 2 + 1
    Wo = (Wi - 1) // 2 + 1
    # column-tap selector: T[w, kw, j] = 1 iff padded column (2j+kw) maps to input column w
    T = np.zeros((Wi, 3, Wo), np.float32)
    for kw in range(3):
        for j in range(Wo):
            col = 2 * j + kw - 1
            if 0 <= col < Wi:
                T[col, kw, j] = 1.0
    # B[(kh,w,c),(j,o)] = sum_kw T[w,kw,j] * W[o,c,kh,kw]  -- contracted einsum, no giant temp.
    B = np.einsum('wkj,ochk->hwcjo', T, w).reshape(3 * Wi * cin, Wo * cout)
    bias_row = np.tile(np.asarray(bias, np.float32), Wo).reshape(1, Wo * cout)
    return B, bias_row, Ho, Wo


def _pad_cin(in_nc, W):
    # smallest channel padding so W*Cin is a multiple of 64 lanes (if cheaply reachable)
    for c in range(in_nc, in_nc + 8):
        if (W * c) % 64 == 0:
            return c
    return in_nc


def precompute_trunk_constants(params, in_hw, groups=4):
    """Build all weight-derived matmul constants exactly once (host-side numpy)."""
    H, W = in_hw
    in_nc = int(params["w1"].shape[1])
    c1 = int(params["w1"].shape[0])
    c2 = int(params["w2"].shape[0])
    nf = int(params["w3"].shape[0])

    cin_p = _pad_cin(in_nc, W)
    w1p = np.zeros((c1, cin_p, 3, 3), np.float32)
    w1p[:, :in_nc] = np.asarray(params["w1"], np.float32)

    B1, bias1, H1, W1 = _conv_constants(w1p, params["b1"], H, W)
    B2, bias2, H2, W2 = _conv_constants(_grouped_to_full(params["w2"], groups),
                                        params["b2"], H1, W1)
    B3, bias3, H3, W3 = _conv_constants(np.asarray(params["w3"], np.float32),
                                        params["b3"], H2, W2)

    # lane-fold for the W part of the global mean, pre-scaled by 1/(H3*W3); the H part is the
    # per-image 0/1 row-sum matrix built in the wrapper.
    fold = np.zeros((W3 * nf, nf), np.float32)
    for j in range(W3):
        fold[j * nf:(j + 1) * nf] = np.eye(nf, dtype=np.float32)
    fold /= float(H3 * W3)

    consts = dict(B1=jnp.asarray(B1), c1=jnp.asarray(bias1),
                  B2=jnp.asarray(B2), c2=jnp.asarray(bias2),
                  B3=jnp.asarray(B3), c3=jnp.asarray(bias3),
                  fold=jnp.asarray(fold))
    meta = dict(in_nc=in_nc, cin_p=cin_p, H=H, W=W,
                H1=H1, W1=W1, C1=c1, H2=H2, W2=W2, C2=c2, H3=H3, W3=W3, C3=nf)
    return consts, meta


# ----------------------------- forward -----------------------------

def _pick_b_tile(N, Ho1, target_rows=256):
    # ~256 LHS rows fills the MXU sublanes on v6e/v7x (128 already fine on v5e)
    bt = max(1, target_rows // max(Ho1, 1))
    bt = min(bt, max(N, 1))
    if N >= 2:
        bt = min(bt, N // 2)        # keep >= 2 grid steps so both v7x TensorCores get work
    return max(bt, 1)


def _const_spec(a):
    nd = a.ndim
    try:
        # block index never changes across the grid -> single buffer, no re-DMA per step
        return pl.BlockSpec(a.shape, lambda n: (0,) * nd, pipeline_mode=pl.Buffered(1))
    except TypeError:
        return pl.BlockSpec(a.shape, lambda n: (0,) * nd)


def cond_trunk_forward(x_nchw, consts, meta):
    N, Cin, H, W = x_nchw.shape
    cin_p = meta["cin_p"]
    nf = meta["C3"]
    H1, H3 = meta["H1"], meta["H3"]

    b_tile = _pick_b_tile(N, H1)
    n_pad = (-N) % b_tile
    grid0 = (N + n_pad) // b_tile

    # NCHW -> (N, H, W*Cin_p): channels fastest (lane dim); zero-pad channels to cin_p and add
    # one zero row top & bottom so every stride-2 row tap is a plain strided load.
    x = jnp.transpose(x_nchw, (0, 2, 3, 1))
    if cin_p > Cin:
        x = jnp.pad(x, ((0, 0), (0, 0), (0, 0), (0, cin_p - Cin)))
    x = x.reshape(N, H, W * cin_p)
    x = jnp.pad(x, ((0, n_pad), (1, 1), (0, 0)))

    # per-image 0/1 row-sum matrix for the fused mean (trace-time constant)
    pool = np.zeros((b_tile, b_tile * H3), np.float32)
    for b in range(b_tile):
        pool[b, b * H3:(b + 1) * H3] = 1.0
    pool = jnp.asarray(pool)

    const_args = (consts["B1"], consts["c1"], consts["B2"], consts["c2"],
                  consts["B3"], consts["c3"], pool, consts["fold"])

    kernel = _make_trunk_kernel(b_tile, meta)
    # NOTE: at much larger spatial sizes the per-step block would additionally be tiled over
    # output rows (v7x only has 64 MiB physical VMEM); at trunk-sized activations one
    # B_TILE-image block plus scratches is only a few hundred KiB.
    out = pl.pallas_call(
        kernel,
        out_shape=jax.ShapeDtypeStruct((grid0, b_tile, nf), jnp.float32),
        grid=(grid0,),
        in_specs=[pl.BlockSpec((b_tile, H + 2, W * cin_p), lambda n: (n, 0, 0))]
                 + [_const_spec(a) for a in const_args],
        out_specs=pl.BlockSpec((1, b_tile, nf), lambda n: (n, 0, 0)),
        scratch_shapes=[
            pltpu.VMEM((b_tile, meta["H1"] + 2, meta["W1"] * meta["C1"]), jnp.float32),
            pltpu.VMEM((b_tile, meta["H2"] + 2, meta["W2"] * meta["C2"]), jnp.float32)],
        compiler_params=pltpu.CompilerParams(
            dimension_semantics=("parallel",),
            vmem_limit_bytes=32 * 1024 * 1024),
    )(x, *const_args)
    return out.reshape(grid0 * b_tile, nf)[:N]


# ----------------- reference (pure JAX) for correctness check -----------------

def _ref_forward(x_nchw, params):
    def conv(x, w, b, groups=1):
        y = lax.conv_general_dilated(
            x, w, window_strides=(2, 2), padding=((1, 1), (1, 1)),
            dimension_numbers=("NCHW", "OIHW", "NCHW"),
            feature_group_count=groups)
        y = y + b[None, :, None, None]
        return jnp.where(y >= 0, y, NEG_SLOPE * y)

    h1 = conv(x_nchw, params["w1"], params["b1"])
    h2 = conv(h1, params["w2"], params["b2"], groups=4)
    h3 = conv(h2, params["w3"], params["b3"])
    return jnp.mean(h3, axis=(2, 3))


# ----------------------------- main -----------------------------

if __name__ == "__main__":
    in_nc, nf = 3, 32
    N, H, W = 8, 16, 16          # N=8 -> B_TILE=4, grid=(2,): batched GEMMs + both v7x TCs busy

    key = jax.random.PRNGKey(0)
    ks = jax.random.split(key, 7)
    params = {
        # conv1: Conv2d(in_nc, nf//2, 3, 2, 1)
        "w1": 0.1 * jax.random.normal(ks[0], (nf // 2, in_nc, 3, 3), jnp.float32),
        "b1": 0.1 * jax.random.normal(ks[1], (nf // 2,), jnp.float32),
        # conv2: Conv2d(nf//2, nf//2, 3, 2, 1, groups=4)
        "w2": 0.1 * jax.random.normal(ks[2], (nf // 2, (nf // 2) // 4, 3, 3), jnp.float32),
        "b2": 0.1 * jax.random.normal(ks[3], (nf // 2,), jnp.float32),
        # conv3: Conv2d(nf//2, nf, 3, 2, 1)
        "w3": 0.1 * jax.random.normal(ks[4], (nf, nf // 2, 3, 3), jnp.float32),
        "b3": 0.1 * jax.random.normal(ks[5], (nf,), jnp.float32),
    }
    x = jax.random.normal(ks[6], (N, in_nc, H, W), jnp.float32)

    # Weight repacking is hoisted: built exactly once, outside the jitted forward.
    consts, meta = precompute_trunk_constants(params, (H, W))
    fwd = jax.jit(lambda xx, cc: cond_trunk_forward(xx, cc, meta))

    out = jax.block_until_ready(fwd(x, consts))
    ref = jax.block_until_ready(_ref_forward(x, params))

    assert out.shape == (N, nf), out.shape
    assert jnp.allclose(out, ref, atol=2e-4, rtol=2e-4), float(jnp.max(jnp.abs(out - ref)))
    print("KERNEL_OK")
</pallas_src>

<mosaic_0001>
module attributes {stable_mosaic.version = 11 : i64} {
  func.func @kernel(%arg0: i32, %arg1: memref<4x18x64xf32, #tpu.memory_space<vmem>>, %arg2: memref<192x128xf32, #tpu.memory_space<vmem>>, %arg3: memref<1x128xf32, #tpu.memory_space<vmem>>, %arg4: memref<384x64xf32, #tpu.memory_space<vmem>>, %arg5: memref<1x64xf32, #tpu.memory_space<vmem>>, %arg6: memref<192x64xf32, #tpu.memory_space<vmem>>, %arg7: memref<1x64xf32, #tpu.memory_space<vmem>>, %arg8: memref<4x8xf32, #tpu.memory_space<vmem>>, %arg9: memref<64x32xf32, #tpu.memory_space<vmem>>, %arg10: memref<1x4x32xf32, #tpu.memory_space<vmem>>, %arg11: memref<4x10x128xf32, #tpu.memory_space<vmem>>, %arg12: memref<4x6x64xf32, #tpu.memory_space<vmem>>) attributes {dimension_semantics = [#tpu.dimension_semantics<parallel>], iteration_bounds = array<i64: 2>, scalar_prefetch = 0 : i64, scratch_operands = 2 : i64, tpu.core_type = #tpu.core_type<tc>, window_params = [{transform_indices = @transform_0, window_bounds = array<i64: 4, 18, 64>}, {pipeline_mode = #tpu.pipeline_mode<synchronous>, transform_indices = @transform_1, window_bounds = array<i64: 192, 128>}, {pipeline_mode = #tpu.pipeline_mode<synchronous>, transform_indices = @transform_2, window_bounds = array<i64: 1, 128>}, {pipeline_mode = #tpu.pipeline_mode<synchronous>, transform_indices = @transform_3, window_bounds = array<i64: 384, 64>}, {pipeline_mode = #tpu.pipeline_mode<synchronous>, transform_indices = @transform_4, window_bounds = array<i64: 1, 64>}, {pipeline_mode = #tpu.pipeline_mode<synchronous>, transform_indices = @transform_5, window_bounds = array<i64: 192, 64>}, {pipeline_mode = #tpu.pipeline_mode<synchronous>, transform_indices = @transform_6, window_bounds = array<i64: 1, 64>}, {pipeline_mode = #tpu.pipeline_mode<synchronous>, transform_indices = @transform_7, window_bounds = array<i64: 4, 8>}, {pipeline_mode = #tpu.pipeline_mode<synchronous>, transform_indices = @transform_8, window_bounds = array<i64: 64, 32>}, {transform_indices = @transform_9, window_bounds = array<i64: 1, 4, 32>}]} {
    %c0 = arith.constant 0 : index
    %c0_0 = arith.constant 0 : index
    %c0_1 = arith.constant 0 : index
    %0 = tpu.strided_load %arg1[%c0, %c0_0, %c0_1] {strides = array<i32: 1, 2, 1>} : memref<4x18x64xf32, #tpu.memory_space<vmem>>, vector<4x8x64xf32>
    %c0_2 = arith.constant 0 : index
    %c1 = arith.constant 1 : index
    %c0_3 = arith.constant 0 : index
    %1 = tpu.strided_load %arg1[%c0_2, %c1, %c0_3] {strides = array<i32: 1, 2, 1>} : memref<4x18x64xf32, #tpu.memory_space<vmem>>, vector<4x8x64xf32>
    %c0_4 = arith.constant 0 : index
    %c2 = arith.constant 2 : index
    %c0_5 = arith.constant 0 : index
    %2 = tpu.strided_load %arg1[%c0_4, %c2, %c0_5] {strides = array<i32: 1, 2, 1>} : memref<4x18x64xf32, #tpu.memory_space<vmem>>, vector<4x8x64xf32>
    %3 = tpu.concatenate %0, %1, %2 in 2 : vector<4x8x64xf32>, vector<4x8x64xf32>, vector<4x8x64xf32> -> vector<4x8x192xf32>
    %4 = vector.shape_cast %3 : vector<4x8x192xf32> to vector<32x192xf32>
    %c0_6 = arith.constant 0 : index
    %c0_7 = arith.constant 0 : index
    %5 = vector.load %arg2[%c0_6, %c0_7] : memref<192x128xf32, #tpu.memory_space<vmem>>, vector<192x128xf32>
    %cst = arith.constant dense<0.000000e+00> : vector<32x128xf32>
    %6 = tpu.matmul %4, %5, %cst {dimension_numbers = #tpu.dot_dimension_numbers<[1], [0], [0], [1], [0, 0, 1, 1], [], []>} : vector<32x192xf32>, vector<192x128xf32>, vector<32x128xf32> -> vector<32x128xf32>
    %c0_8 = arith.constant 0 : index
    %c0_9 = arith.constant 0 : index
    %7 = vector.load %arg3[%c0_8, %c0_9] : memref<1x128xf32, #tpu.memory_space<vmem>>, vector<1x128xf32>
    %8 = vector.broadcast %7 : vector<1x128xf32> to vector<32x128xf32>
    %9 = arith.addf %6, %8 : vector<32x128xf32>
    %cst_10 = arith.constant 0.000000e+00 : f32
    %10 = vector.broadcast %cst_10 : f32 to vector<32x128xf32>
    %11 = arith.cmpf oge, %9, %10 : vector<32x128xf32>
    %cst_11 = arith.constant 1.000000e-01 : f32
    %12 = vector.broadcast %cst_11 : f32 to vector<32x128xf32>
    %13 = arith.mulf %12, %9 : vector<32x128xf32>
    %14 = arith.select %11, %9, %13 : vector<32x128xi1>, vector<32x128xf32>
    %cst_12 = arith.constant 0.000000e+00 : f32
    %15 = vector.broadcast %cst_12 : f32 to vector<4x1x128xf32>
    %c0_13 = arith.constant 0 : index
    %c0_14 = arith.constant 0 : index
    %c0_15 = arith.constant 0 : index
    %16 = vector.load %arg11[%c0_13, %c0_14, %c0_15] : memref<4x10x128xf32, #tpu.memory_space<vmem>>, vector<4x1x128xf32>
    tpu.vector_store %arg11[%c0_13, %c0_14, %c0_15], %15 {strides = array<i32>} : memref<4x10x128xf32, #tpu.memory_space<vmem>>, vector<4x1x128xf32>,
    %cst_16 = arith.constant 0.000000e+00 : f32
    %17 = vector.broadcast %cst_16 : f32 to vector<4x1x128xf32>
    %c0_17 = arith.constant 0 : index
    %c9 = arith.constant 9 : index
    %c0_18 = arith.constant 0 : index
    %18 = vector.load %arg11[%c0_17, %c9, %c0_18] : memref<4x10x128xf32, #tpu.memory_space<vmem>>, vector<4x1x128xf32>
    tpu.vector_store %arg11[%c0_17, %c9, %c0_18], %17 {strides = array<i32>} : memref<4x10x128xf32, #tpu.memory_space<vmem>>, vector<4x1x128xf32>,
    %19 = vector.extract_strided_slice %14 {offsets = [0, 0], sizes = [8, 128], strides = [1, 1]} : vector<32x128xf32> to vector<8x128xf32>
    %c0_19 = arith.constant 0 : index
    %c1_20 = arith.constant 1 : index
    %c0_21 = arith.constant 0 : index
    %20 = vector.load %arg11[%c0_19, %c1_20, %c0_21] : memref<4x10x128xf32, #tpu.memory_space<vmem>>, vector<1x8x128xf32>
    %21 = vector.shape_cast %20 : vector<1x8x128xf32> to vector<8x128xf32>
    %22 = vector.shape_cast %19 : vector<8x128xf32> to vector<1x8x128xf32>
    tpu.vector_store %arg11[%c0_19, %c1_20, %c0_21], %22 {strides = array<i32>} : memref<4x10x128xf32, #tpu.memory_space<vmem>>, vector<1x8x128xf32>,
    %23 = vector.extract_strided_slice %14 {offsets = [8, 0], sizes = [8, 128], strides = [1, 1]} : vector<32x128xf32> to vector<8x128xf32>
    %c1_22 = arith.constant 1 : index
    %c1_23 = arith.constant 1 : index
    %c0_24 = arith.constant 0 : index
    %24 = vector.load %arg11[%c1_22, %c1_23, %c0_24] : memref<4x10x128xf32, #tpu.memory_space<vmem>>, vector<1x8x128xf32>
    %25 = vector.shape_cast %24 : vector<1x8x128xf32> to vector<8x128xf32>
    %26 = vector.shape_cast %23 : vector<8x128xf32> to vector<1x8x128xf32>
    tpu.vector_store %arg11[%c1_22, %c1_23, %c0_24], %26 {strides = array<i32>} : memref<4x10x128xf32, #tpu.memory_space<vmem>>, vector<1x8x128xf32>,
    %27 = vector.extract_strided_slice %14 {offsets = [16, 0], sizes = [8, 128], strides = [1, 1]} : vector<32x128xf32> to vector<8x128xf32>
    %c2_25 = arith.constant 2 : index
    %c1_26 = arith.constant 1 : index
    %c0_27 = arith.constant 0 : index
    %28 = vector.load %arg11[%c2_25, %c1_26, %c0_27] : memref<4x10x128xf32, #tpu.memory_space<vmem>>, vector<1x8x128xf32>
    %29 = vector.shape_cast %28 : vector<1x8x128xf32> to vector<8x128xf32>
    %30 = vector.shape_cast %27 : vector<8x128xf32> to vector<1x8x128xf32>
    tpu.vector_store %arg11[%c2_25, %c1_26, %c0_27], %30 {strides = array<i32>} : memref<4x10x128xf32, #tpu.memory_space<vmem>>, vector<1x8x128xf32>,
    %31 = vector.extract_strided_slice %14 {offsets = [24, 0], sizes = [8, 128], strides = [1, 1]} : vector<32x128xf32> to vector<8x128xf32>
    %c3 = arith.constant 3 : index
    %c1_28 = arith.constant 1 : index
    %c0_29 = arith.constant 0 : index
    %32 = vector.load %arg11[%c3, %c1_28, %c0_29] : memref<4x10x128xf32, #tpu.memory_space<vmem>>, vector<1x8x128xf32>
    %33 = vector.shape_cast %32 : vector<1x8x128xf32> to vector<8x128xf32>
    %34 = vector.shape_cast %31 : vector<8x128xf32> to vector<1x8x128xf32>
    tpu.vector_store %arg11[%c3, %c1_28, %c0_29], %34 {strides = array<i32>} : memref<4x10x128xf32, #tpu.memory_space<vmem>>, vector<1x8x128xf32>,
    %c0_30 = arith.constant 0 : index
    %c0_31 = arith.constant 0 : index
    %c0_32 = arith.constant 0 : index
    %35 = tpu.strided_load %arg11[%c0_30, %c0_31, %c0_32] {strides = array<i32: 1, 2, 1>} : memref<4x10x128xf32, #tpu.memory_space<vmem>>, vector<4x4x128xf32>
    %c0_33 = arith.constant 0 : index
    %c1_34 = arith.constant 1 : index
    %c0_35 = arith.constant 0 : index
    %36 = tpu.strided_load %arg11[%c0_33, %c1_34, %c0_35] {strides = array<i32: 1, 2, 1>} : memref<4x10x128xf32, #tpu.memory_space<vmem>>, vector<4x4x128xf32>
    %c0_36 = arith.constant 0 : index
    %c2_37 = arith.constant 2 : index
    %c0_38 = arith.constant 0 : index
    %37 = tpu.strided_load %arg11[%c0_36, %c2_37, %c0_38] {strides = array<i32: 1, 2, 1>} : memref<4x10x128xf32, #tpu.memory_space<vmem>>, vector<4x4x128xf32>
    %38 = tpu.concatenate %35, %36, %37 in 2 : vector<4x4x128xf32>, vector<4x4x128xf32>, vector<4x4x128xf32> -> vector<4x4x384xf32>
    %39 = vector.shape_cast %38 : vector<4x4x384xf32> to vector<16x384xf32>
    %c0_39 = arith.constant 0 : index
    %c0_40 = arith.constant 0 : index
    %40 = vector.load %arg4[%c0_39, %c0_40] : memref<384x64xf32, #tpu.memory_space<vmem>>, vector<384x64xf32>
    %cst_41 = arith.constant dense<0.000000e+00> : vector<16x64xf32>
    %41 = tpu.matmul %39, %40, %cst_41 {dimension_numbers = #tpu.dot_dimension_numbers<[1], [0], [0], [1], [0, 0, 1, 1], [], []>} : vector<16x384xf32>, vector<384x64xf32>, vector<16x64xf32> -> vector<16x64xf32>
    %c0_42 = arith.constant 0 : index
    %c0_43 = arith.constant 0 : index
    %42 = vector.load %arg5[%c0_42, %c0_43] : memref<1x64xf32, #tpu.memory_space<vmem>>, vector<1x64xf32>
    %43 = vector.broadcast %42 : vector<1x64xf32> to vector<16x64xf32>
    %44 = arith.addf %41, %43 : vector<16x64xf32>
    %cst_44 = arith.constant 0.000000e+00 : f32
    %45 = vector.broadcast %cst_44 : f32 to vector<16x64xf32>
    %46 = arith.cmpf oge, %44, %45 : vector<16x64xf32>
    %cst_45 = arith.constant 1.000000e-01 : f32
    %47 = vector.broadcast %cst_45 : f32 to vector<16x64xf32>
    %48 = arith.mulf %47, %44 : vector<16x64xf32>
    %49 = arith.select %46, %44, %48 : vector<16x64xi1>, vector<16x64xf32>
    %cst_46 = arith.constant 0.000000e+00 : f32
    %50 = vector.broadcast %cst_46 : f32 to vector<4x1x64xf32>
    %c0_47 = arith.constant 0 : index
    %c0_48 = arith.constant 0 : index
    %c0_49 = arith.constant 0 : index
    %51 = vector.load %arg12[%c0_47, %c0_48, %c0_49] : memref<4x6x64xf32, #tpu.memory_space<vmem>>, vector<4x1x64xf32>
    tpu.vector_store %arg12[%c0_47, %c0_48, %c0_49], %50 {strides = array<i32>} : memref<4x6x64xf32, #tpu.memory_space<vmem>>, vector<4x1x64xf32>,
    %cst_50 = arith.constant 0.000000e+00 : f32
    %52 = vector.broadcast %cst_50 : f32 to vector<4x1x64xf32>
    %c0_51 = arith.constant 0 : index
    %c5 = arith.constant 5 : index
    %c0_52 = arith.constant 0 : index
    %53 = vector.load %arg12[%c0_51, %c5, %c0_52] : memref<4x6x64xf32, #tpu.memory_space<vmem>>, vector<4x1x64xf32>
    tpu.vector_store %arg12[%c0_51, %c5, %c0_52], %52 {strides = array<i32>} : memref<4x6x64xf32, #tpu.memory_space<vmem>>, vector<4x1x64xf32>,
    %54 = vector.extract_strided_slice %49 {offsets = [0, 0], sizes = [4, 64], strides = [1, 1]} : vector<16x64xf32> to vector<4x64xf32>
    %c0_53 = arith.constant 0 : index
    %c1_54 = arith.constant 1 : index
    %c0_55 = arith.constant 0 : index
    %55 = vector.load %arg12[%c0_53, %c1_54, %c0_55] : memref<4x6x64xf32, #tpu.memory_space<vmem>>, vector<1x4x64xf32>
    %56 = vector.shape_cast %55 : vector<1x4x64xf32> to vector<4x64xf32>
    %57 = vector.shape_cast %54 : vector<4x64xf32> to vector<1x4x64xf32>
    tpu.vector_store %arg12[%c0_53, %c1_54, %c0_55], %57 {strides = array<i32>} : memref<4x6x64xf32, #tpu.memory_space<vmem>>, vector<1x4x64xf32>,
    %58 = vector.extract_strided_slice %49 {offsets = [4, 0], sizes = [4, 64], strides = [1, 1]} : vector<16x64xf32> to vector<4x64xf32>
    %c1_56 = arith.constant 1 : index
    %c1_57 = arith.constant 1 : index
    %c0_58 = arith.constant 0 : index
    %59 = vector.load %arg12[%c1_56, %c1_57, %c0_58] : memref<4x6x64xf32, #tpu.memory_space<vmem>>, vector<1x4x64xf32>
    %60 = vector.shape_cast %59 : vector<1x4x64xf32> to vector<4x64xf32>
    %61 = vector.shape_cast %58 : vector<4x64xf32> to vector<1x4x64xf32>
    tpu.vector_store %arg12[%c1_56, %c1_57, %c0_58], %61 {strides = array<i32>} : memref<4x6x64xf32, #tpu.memory_space<vmem>>, vector<1x4x64xf32>,
    %62 = vector.extract_strided_slice %49 {offsets = [8, 0], sizes = [4, 64], strides = [1, 1]} : vector<16x64xf32> to vector<4x64xf32>
    %c2_59 = arith.constant 2 : index
    %c1_60 = arith.constant 1 : index
    %c0_61 = arith.constant 0 : index
    %63 = vector.load %arg12[%c2_59, %c1_60, %c0_61] : memref<4x6x64xf32, #tpu.memory_space<vmem>>, vector<1x4x64xf32>
    %64 = vector.shape_cast %63 : vector<1x4x64xf32> to vector<4x64xf32>
    %65 = vector.shape_cast %62 : vector<4x64xf32> to vector<1x4x64xf32>
    tpu.vector_store %arg12[%c2_59, %c1_60, %c0_61], %65 {strides = array<i32>} : memref<4x6x64xf32, #tpu.memory_space<vmem>>, vector<1x4x64xf32>,
    %66 = vector.extract_strided_slice %49 {offsets = [12, 0], sizes = [4, 64], strides = [1, 1]} : vector<16x64xf32> to vector<4x64xf32>
    %c3_62 = arith.constant 3 : index
    %c1_63 = arith.constant 1 : index
    %c0_64 = arith.constant 0 : index
    %67 = vector.load %arg12[%c3_62, %c1_63, %c0_64] : memref<4x6x64xf32, #tpu.memory_space<vmem>>, vector<1x4x64xf32>
    %68 = vector.shape_cast %67 : vector<1x4x64xf32> to vector<4x64xf32>
    %69 = vector.shape_cast %66 : vector<4x64xf32> to vector<1x4x64xf32>
    tpu.vector_store %arg12[%c3_62, %c1_63, %c0_64], %69 {strides = array<i32>} : memref<4x6x64xf32, #tpu.memory_space<vmem>>, vector<1x4x64xf32>,
    %c0_65 = arith.constant 0 : index
    %c0_66 = arith.constant 0 : index
    %c0_67 = arith.constant 0 : index
    %70 = tpu.strided_load %arg12[%c0_65, %c0_66, %c0_67] {strides = array<i32: 1, 2, 1>} : memref<4x6x64xf32, #tpu.memory_space<vmem>>, vector<4x2x64xf32>
    %c0_68 = arith.constant 0 : index
    %c1_69 = arith.constant 1 : index
    %c0_70 = arith.constant 0 : index
    %71 = tpu.strided_load %arg12[%c0_68, %c1_69, %c0_70] {strides = array<i32: 1, 2, 1>} : memref<4x6x64xf32, #tpu.memory_space<vmem>>, vector<4x2x64xf32>
    %c0_71 = arith.constant 0 : index
    %c2_72 = arith.constant 2 : index
    %c0_73 = arith.constant 0 : index
    %72 = tpu.strided_load %arg12[%c0_71, %c2_72, %c0_73] {strides = array<i32: 1, 2, 1>} : memref<4x6x64xf32, #tpu.memory_space<vmem>>, vector<4x2x64xf32>
    %73 = tpu.concatenate %70, %71, %72 in 2 : vector<4x2x64xf32>, vector<4x2x64xf32>, vector<4x2x64xf32> -> vector<4x2x192xf32>
    %74 = vector.shape_cast %73 : vector<4x2x192xf32> to vector<8x192xf32>
    %c0_74 = arith.constant 0 : index
    %c0_75 = arith.constant 0 : index
    %75 = vector.load %arg6[%c0_74, %c0_75] : memref<192x64xf32, #tpu.memory_space<vmem>>, vector<192x64xf32>
    %cst_76 = arith.constant dense<0.000000e+00> : vector<8x64xf32>
    %76 = tpu.matmul %74, %75, %cst_76 {dimension_numbers = #tpu.dot_dimension_numbers<[1], [0], [0], [1], [0, 0, 1, 1], [], []>} : vector<8x192xf32>, vector<192x64xf32>, vector<8x64xf32> -> vector<8x64xf32>
    %c0_77 = arith.constant 0 : index
    %c0_78 = arith.constant 0 : index
    %77 = vector.load %arg7[%c0_77, %c0_78] : memref<1x64xf32, #tpu.memory_space<vmem>>, vector<1x64xf32>
    %78 = vector.broadcast %77 : vector<1x64xf32> to vector<8x64xf32>
    %79 = arith.addf %76, %78 : vector<8x64xf32>
    %cst_79 = arith.constant 0.000000e+00 : f32
    %80 = vector.broadcast %cst_79 : f32 to vector<8x64xf32>
    %81 = arith.cmpf oge, %79, %80 : vector<8x64xf32>
    %cst_80 = arith.constant 1.000000e-01 : f32
    %82 = vector.broadcast %cst_80 : f32 to vector<8x64xf32>
    %83 = arith.mulf %82, %79 : vector<8x64xf32>
    %84 = arith.select %81, %79, %83 : vector<8x64xi1>, vector<8x64xf32>
    %c0_81 = arith.constant 0 : index
    %c0_82 = arith.constant 0 : index
    %85 = vector.load %arg8[%c0_81, %c0_82] : memref<4x8xf32, #tpu.memory_space<vmem>>, vector<4x8xf32>
    %cst_83 = arith.constant dense<0.000000e+00> : vector<4x64xf32>
    %86 = tpu.matmul %85, %84, %cst_83 {dimension_numbers = #tpu.dot_dimension_numbers<[1], [0], [0], [1], [0, 0, 1, 1], [], []>} : vector<4x8xf32>, vector<8x64xf32>, vector<4x64xf32> -> vector<4x64xf32>
    %c0_84 = arith.constant 0 : index
    %c0_85 = arith.constant 0 : index
    %87 = vector.load %arg9[%c0_84, %c0_85] : memref<64x32xf32, #tpu.memory_space<vmem>>, vector<64x32xf32>
    %cst_86 = arith.constant dense<0.000000e+00> : vector<4x32xf32>
    %88 = tpu.matmul %86, %87, %cst_86 {dimension_numbers = #tpu.dot_dimension_numbers<[1], [0], [0], [1], [0, 0, 1, 1], [], []>} : vector<4x64xf32>, vector<64x32xf32>, vector<4x32xf32> -> vector<4x32xf32>
    %c0_87 = arith.constant 0 : index
    %c0_88 = arith.constant 0 : index
    %c0_89 = arith.constant 0 : index
    %89 = vector.load %arg10[%c0_87, %c0_88, %c0_89] : memref<1x4x32xf32, #tpu.memory_space<vmem>>, vector<1x4x32xf32>
    %90 = vector.shape_cast %89 : vector<1x4x32xf32> to vector<4x32xf32>
    %91 = vector.shape_cast %88 : vector<4x32xf32> to vector<1x4x32xf32>
    tpu.vector_store %arg10[%c0_87, %c0_88, %c0_89], %91 {strides = array<i32>} : memref<1x4x32xf32, #tpu.memory_space<vmem>>, vector<1x4x32xf32>,
    return
  }
  func.func @transform_0(%arg0: i32) -> (i32, i32, i32) {
    %c0_i32 = arith.constant 0 : i32
    %c0_i32_0 = arith.constant 0 : i32
    %c0_i32_1 = arith.constant 0 : i32
    return %arg0, %c0_i32, %c0_i32_0 : i32, i32, i32
  }
  func.func @transform_1(%arg0: i32) -> (i32, i32) {
    %c0_i32 = arith.constant 0 : i32
    %c0_i32_0 = arith.constant 0 : i32
    %c0_i32_1 = arith.constant 0 : i32
    return %c0_i32, %c0_i32_0 : i32, i32
  }
  func.func @transform_2(%arg0: i32) -> (i32, i32) {
    %c0_i32 = arith.constant 0 : i32
    %c0_i32_0 = arith.constant 0 : i32
    %c0_i32_1 = arith.constant 0 : i32
    return %c0_i32, %c0_i32_0 : i32, i32
  }
  func.func @transform_3(%arg0: i32) -> (i32, i32) {
    %c0_i32 = arith.constant 0 : i32
    %c0_i32_0 = arith.constant 0 : i32
    %c0_i32_1 = arith.constant 0 : i32
    return %c0_i32, %c0_i32_0 : i32, i32
  }
  func.func @transform_4(%arg0: i32) -> (i32, i32) {
    %c0_i32 = arith.constant 0 : i32
    %c0_i32_0 = arith.constant 0 : i32
    %c0_i32_1 = arith.constant 0 : i32
    return %c0_i32, %c0_i32_0 : i32, i32
  }
  func.func @transform_5(%arg0: i32) -> (i32, i32) {
    %c0_i32 = arith.constant 0 : i32
    %c0_i32_0 = arith.constant 0 : i32
    %c0_i32_1 = arith.constant 0 : i32
    return %c0_i32, %c0_i32_0 : i32, i32
  }
  func.func @transform_6(%arg0: i32) -> (i32, i32) {
    %c0_i32 = arith.constant 0 : i32
    %c0_i32_0 = arith.constant 0 : i32
    %c0_i32_1 = arith.constant 0 : i32
    return %c0_i32, %c0_i32_0 : i32, i32
  }
  func.func @transform_7(%arg0: i32) -> (i32, i32) {
    %c0_i32 = arith.constant 0 : i32
    %c0_i32_0 = arith.constant 0 : i32
    %c0_i32_1 = arith.constant 0 : i32
    return %c0_i32, %c0_i32_0 : i32, i32
  }
  func.func @transform_8(%arg0: i32) -> (i32, i32) {
    %c0_i32 = arith.constant 0 : i32
    %c0_i32_0 = arith.constant 0 : i32
    %c0_i32_1 = arith.constant 0 : i32
    return %c0_i32, %c0_i32_0 : i32, i32
  }
  func.func @transform_9(%arg0: i32) -> (i32, i32, i32) {
    %c0_i32 = arith.constant 0 : i32
    %c0_i32_0 = arith.constant 0 : i32
    %c0_i32_1 = arith.constant 0 : i32
    return %arg0, %c0_i32, %c0_i32_0 : i32, i32, i32
  }
}

</mosaic_0001>

<llo_original>
// kernel: _lambda_.1
$region0: #{_lambda_.1}
  #allocation0 [shape = 'u32[]', space=smem, size = 0x4, offset = 0x4, fixed_abs, tag = 'smem constant byte address 0x4 - core index']
  #allocation1 [shape = 'u32[72,128]{1,0:T(1,128)}', space=vmem, size = 0x9000, scoped, tag = 'internal scratch']
  #allocation2 [shape = 'f32[4,10,128]{2,1,0:T(8,128)}', space=vmem, size = 0x8000, scoped, tag = 'scratch operand']
  #allocation3 [shape = 'f32[4,6,64]{2,1,0:T(8,128)}', space=vmem, size = 0x4000, scoped, tag = 'scratch operand']
  %s0 = inlined_call_operand.vmem [shape: f32[8,18,64], index: 0, kind: input, shape index: {}]
  %s1 = inlined_call_operand.vmem [shape: f32[192,128], index: 1, kind: input, shape index: {}]
  %s2 = inlined_call_operand.vmem [shape: f32[1,128], index: 2, kind: input, shape index: {}]
  %s3 = inlined_call_operand.vmem [shape: f32[384,64], index: 3, kind: input, shape index: {}]
  %s4 = inlined_call_operand.vmem [shape: f32[1,64], index: 4, kind: input, shape index: {}]
  %s5 = inlined_call_operand.vmem [shape: f32[192,64], index: 5, kind: input, shape index: {}]
  %s6 = inlined_call_operand.vmem [shape: f32[1,64], index: 6, kind: input, shape index: {}]
  %s7 = inlined_call_operand.vmem [shape: f32[4,8], index: 7, kind: input, shape index: {}]
  %s8 = inlined_call_operand.vmem [shape: f32[64,32], index: 8, kind: input, shape index: {}]
  %s9 = inlined_call_operand.hbm [shape: f32[2,4,32], index: 9, kind: output, shape index: {}]
  %s10 = sld [smem:[#allocation0]]
  $region69: #{_lambda_.1} parent=0
    _
  %s12 = ssub.s32 1, %s10
  %s13 = scalar_select 0, %s12, %s10
  $region1: #{_lambda_.1} parent=0
    #allocation4 [shape = 'u8[4096]{0}', space=vmem, size = 0x1000, scoped, tag = 'output window, operand 0']
    #allocation5 [shape = 's32[2]{0}', space=sflag, size = 0x8, scoped, tag = 'scoped memory for _lambda_.1']
    %14 = vsyncpa [#allocation5], 0
    %s15 = scalar_lea.sflag [#allocation5], 1
    %16 = vsyncpa %s15, 0
    loop: start=0, step=1, limit=4
    $region2: #{_lambda_.1} parent=1 // loop_pre_header
      _
    $region3: #{_lambda_.1} parent=1 // loop_header
      %s18 = sphi 0, %s22
      %p19 = scmp.ge.s32.totalorder %s18, 4
      %s28 = sphi 0, %s30
      %s31 = sphi 0, %s28
      %s32 = sphi 0, %s31
      %s48 = sphi 0, %s32
      %s52 = sphi 0, %s52
      %s54 = sphi 0, %s52
      %s55 = sphi 0, %s54
      %s69 = sphi 0, %s55
      %s73 = sphi 0, %s73
      %s75 = sphi 0, %s73
      %s76 = sphi 0, %s75
      %s90 = sphi 0, %s76
      %s94 = sphi 0, %s94
      %s96 = sphi 0, %s94
      %s97 = sphi 0, %s96
      %s111 = sphi 0, %s97
      %s115 = sphi 0, %s115
      %s117 = sphi 0, %s115
      %s118 = sphi 0, %s117
      %s132 = sphi 0, %s118
      %s136 = sphi 0, %s136
      %s138 = sphi 0, %s136
      %s139 = sphi 0, %s138
      %s153 = sphi 0, %s139
      %s157 = sphi 0, %s157
      %s159 = sphi 0, %s157
      %s160 = sphi 0, %s159
      %s174 = sphi 0, %s160
      %s178 = sphi 0, %s178
      %s180 = sphi 0, %s178
      %s181 = sphi 0, %s180
      %s195 = sphi 0, %s181
      %s199 = sphi 0, %s199
      %s201 = sphi 0, %s199
      %s202 = sphi 0, %s201
      %s216 = sphi 0, %s202
      %s222 = sphi 0, %s224
      %s225 = sphi 0, %s222
      %s226 = sphi 0, %s225
      %s242 = sphi 0, %s226
    $region4: #{_lambda_.1} parent=1 // loop_header_branch
      %21 = sbr.rel (%p19) target = $region8
    $region5: #{_lambda_.1} parent=1 // loop_body
      %s23 = ssub.s32 %s18, 1
      %s24 = ssub.s32 %s18, 2
      %s25 = sadd.s32 %s18, 1
      %s26 = ssub.s32 %s18, %s25
      %p27 = scmp.eq.s32.totalorder %s26, 0
      %s29 = sadd.s32 %s28, 1
      %s30 = scalar_select %p27, %s28, %s29
      %p33 = pneg %p27
      %p34 = scmp.eq.s32.totalorder %s18, 1
      %p35 = por %p33, %p34
      %p36 = scmp.ne.s32.totalorder %s28, %s31
      %p37 = scmp.eq.s32.totalorder %s18, 0
      %p38 = por %p36, %p37
      %p39 = scmp.ne.s32.totalorder %s28, %s31
      %p40 = scmp.eq.s32.totalorder %s23, 1
      %p41 = por %p39, %p40
      %p42 = scmp.ne.s32.totalorder %s31, %s32
      %p43 = scmp.eq.s32.totalorder %s23, 0
      %p44 = por %p42, %p43
      %p45 = scmp.ne.s32.totalorder %s31, %s32
      %p46 = scmp.eq.s32.totalorder %s24, 1
      %p47 = por %p45, %p46
      %p49 = scmp.ne.s32.totalorder %s32, %s48
      %p50 = scmp.eq.s32.totalorder %s24, 0
      %p51 = por %p49, %p50
      %s53 = sadd.s32 %s52, 1
      %p56 = scmp.eq.s32.totalorder %s18, 1
      %p57 = scmp.ne.s32.totalorder %s52, %s54
      %p58 = scmp.eq.s32.totalorder %s18, 0
      %p59 = por %p57, %p58
      %p60 = scmp.ne.s32.totalorder %s52, %s54
      %p61 = scmp.eq.s32.totalorder %s23, 1
      %p62 = por %p60, %p61
      %p63 = scmp.ne.s32.totalorder %s54, %s55
      %p64 = scmp.eq.s32.totalorder %s23, 0
      %p65 = por %p63, %p64
      %p66 = scmp.ne.s32.totalorder %s54, %s55
      %p67 = scmp.eq.s32.totalorder %s24, 1
      %p68 = por %p66, %p67
      %p70 = scmp.ne.s32.totalorder %s55, %s69
      %p71 = scmp.eq.s32.totalorder %s24, 0
      %p72 = por %p70, %p71
      %s74 = sadd.s32 %s73, 1
      %p77 = scmp.eq.s32.totalorder %s18, 1
      %p78 = scmp.ne.s32.totalorder %s73, %s75
      %p79 = scmp.eq.s32.totalorder %s18, 0
      %p80 = por %p78, %p79
      %p81 = scmp.ne.s32.totalorder %s73, %s75
      %p82 = scmp.eq.s32.totalorder %s23, 1
      %p83 = por %p81, %p82
      %p84 = scmp.ne.s32.totalorder %s75, %s76
      %p85 = scmp.eq.s32.totalorder %s23, 0
      %p86 = por %p84, %p85
      %p87 = scmp.ne.s32.totalorder %s75, %s76
      %p88 = scmp.eq.s32.totalorder %s24, 1
      %p89 = por %p87, %p88
      %p91 = scmp.ne.s32.totalorder %s76, %s90
      %p92 = scmp.eq.s32.totalorder %s24, 0
      %p93 = por %p91, %p92
      %s95 = sadd.s32 %s94, 1
      %p98 = scmp.eq.s32.totalorder %s18, 1
      %p99 = scmp.ne.s32.totalorder %s94, %s96
      %p100 = scmp.eq.s32.totalorder %s18, 0
      %p101 = por %p99, %p100
      %p102 = scmp.ne.s32.totalorder %s94, %s96
      %p103 = scmp.eq.s32.totalorder %s23, 1
      %p104 = por %p102, %p103
      %p105 = scmp.ne.s32.totalorder %s96, %s97
      %p106 = scmp.eq.s32.totalorder %s23, 0
      %p107 = por %p105, %p106
      %p108 = scmp.ne.s32.totalorder %s96, %s97
      %p109 = scmp.eq.s32.totalorder %s24, 1
      %p110 = por %p108, %p109
      %p112 = scmp.ne.s32.totalorder %s97, %s111
      %p113 = scmp.eq.s32.totalorder %s24, 0
      %p114 = por %p112, %p113
      %s116 = sadd.s32 %s115, 1
      %p119 = scmp.eq.s32.totalorder %s18, 1
      %p120 = scmp.ne.s32.totalorder %s115, %s117
      %p121 = scmp.eq.s32.totalorder %s18, 0
      %p122 = por %p120, %p121
      %p123 = scmp.ne.s32.totalorder %s115, %s117
      %p124 = scmp.eq.s32.totalorder %s23, 1
      %p125 = por %p123, %p124
      %p126 = scmp.ne.s32.totalorder %s117, %s118
      %p127 = scmp.eq.s32.totalorder %s23, 0
      %p128 = por %p126, %p127
      %p129 = scmp.ne.s32.totalorder %s117, %s118
      %p130 = scmp.eq.s32.totalorder %s24, 1
      %p131 = por %p129, %p130
      %p133 = scmp.ne.s32.totalorder %s118, %s132
      %p134 = scmp.eq.s32.totalorder %s24, 0
      %p135 = por %p133, %p134
      %s137 = sadd.s32 %s136, 1
      %p140 = scmp.eq.s32.totalorder %s18, 1
      %p141 = scmp.ne.s32.totalorder %s136, %s138
      %p142 = scmp.eq.s32.totalorder %s18, 0
      %p143 = por %p141, %p142
      %p144 = scmp.ne.s32.totalorder %s136, %s138
      %p145 = scmp.eq.s32.totalorder %s23, 1
      %p146 = por %p144, %p145
      %p147 = scmp.ne.s32.totalorder %s138, %s139
      %p148 = scmp.eq.s32.totalorder %s23, 0
      %p149 = por %p147, %p148
      %p150 = scmp.ne.s32.totalorder %s138, %s139
      %p151 = scmp.eq.s32.totalorder %s24, 1
      %p152 = por %p150, %p151
      %p154 = scmp.ne.s32.totalorder %s139, %s153
      %p155 = scmp.eq.s32.totalorder %s24, 0
      %p156 = por %p154, %p155
      %s158 = sadd.s32 %s157, 1
      %p161 = scmp.eq.s32.totalorder %s18, 1
      %p162 = scmp.ne.s32.totalorder %s157, %s159
      %p163 = scmp.eq.s32.totalorder %s18, 0
      %p164 = por %p162, %p163
      %p165 = scmp.ne.s32.totalorder %s157, %s159
      %p166 = scmp.eq.s32.totalorder %s23, 1
      %p167 = por %p165, %p166
      %p168 = scmp.ne.s32.totalorder %s159, %s160
      %p169 = scmp.eq.s32.totalorder %s23, 0
      %p170 = por %p168, %p169
      %p171 = scmp.ne.s32.totalorder %s159, %s160
      %p172 = scmp.eq.s32.totalorder %s24, 1
      %p173 = por %p171, %p172
      %p175 = scmp.ne.s32.totalorder %s160, %s174
      %p176 = scmp.eq.s32.totalorder %s24, 0
      %p177 = por %p175, %p176
      %s179 = sadd.s32 %s178, 1
      %p182 = scmp.eq.s32.totalorder %s18, 1
      %p183 = scmp.ne.s32.totalorder %s178, %s180
      %p184 = scmp.eq.s32.totalorder %s18, 0
      %p185 = por %p183, %p184
      %p186 = scmp.ne.s32.totalorder %s178, %s180
      %p187 = scmp.eq.s32.totalorder %s23, 1
      %p188 = por %p186, %p187
      %p189 = scmp.ne.s32.totalorder %s180, %s181
      %p190 = scmp.eq.s32.totalorder %s23, 0
      %p191 = por %p189, %p190
      %p192 = scmp.ne.s32.totalorder %s180, %s181
      %p193 = scmp.eq.s32.totalorder %s24, 1
      %p194 = por %p192, %p193
      %p196 = scmp.ne.s32.totalorder %s181, %s195
      %p197 = scmp.eq.s32.totalorder %s24, 0
      %p198 = por %p196, %p197
      %s200 = sadd.s32 %s199, 1
      %p203 = scmp.eq.s32.totalorder %s18, 1
      %p204 = scmp.ne.s32.totalorder %s199, %s201
      %p205 = scmp.eq.s32.totalorder %s18, 0
      %p206 = por %p204, %p205
      %p207 = scmp.ne.s32.totalorder %s199, %s201
      %p208 = scmp.eq.s32.totalorder %s23, 1
      %p209 = por %p207, %p208
      %p210 = scmp.ne.s32.totalorder %s201, %s202
      %p211 = scmp.eq.s32.totalorder %s23, 0
      %p212 = por %p210, %p211
      %p213 = scmp.ne.s32.totalorder %s201, %s202
      %p214 = scmp.eq.s32.totalorder %s24, 1
      %p215 = por %p213, %p214
      %p217 = scmp.ne.s32.totalorder %s202, %s216
      %p218 = scmp.eq.s32.totalorder %s24, 0
      %p219 = por %p217, %p218
      %s220 = ssub.s32 %s18, %s25
      %p221 = scmp.eq.s32.totalorder %s220, 0
      %s223 = sadd.s32 %s222, 1
      %s224 = scalar_select %p221, %s222, %s223
      %p227 = pneg %p221
      %p228 = scmp.eq.s32.totalorder %s18, 1
      %p229 = por %p227, %p228
      %p230 = scmp.ne.s32.totalorder %s222, %s225
      %p231 = scmp.eq.s32.totalorder %s18, 0
      %p232 = por %p230, %p231
      %p233 = scmp.ne.s32.totalorder %s222, %s225
      %p234 = scmp.eq.s32.totalorder %s23, 1
      %p235 = por %p233, %p234
      %p236 = scmp.ne.s32.totalorder %s225, %s226
      %p237 = scmp.eq.s32.totalorder %s23, 0
      %p238 = por %p236, %p237
      %p239 = scmp.ne.s32.totalorder %s225, %s226
      %p240 = scmp.eq.s32.totalorder %s24, 1
      %p241 = por %p239, %p240
      %p243 = scmp.ne.s32.totalorder %s226, %s242
      %p244 = scmp.eq.s32.totalorder %s24, 0
      %p245 = por %p243, %p244
      %p246 = scmp.le.s32.totalorder 1, %s18
      %p247 = scmp.lt.s32.totalorder %s18, 3
      %p248 = pnand %p246, %p247
      %p249 = pneg %p248
      // Predicated region
      $region9: #{_lambda_.1} parent=5 // pred_check
        _
      $region10: #{_lambda_.1} parent=5 // pred_check_branch
        %251 = sbr.rel (%p248) target = $region12
      $region11: #{_lambda_.1} parent=5 // pred_region
        %s252 = ssub.s32 %s18, 1
        // Predicated region
        $region13: #{_lambda_.1} parent=11 // pred_check
          %p253 = pneg %p65
        $region14: #{_lambda_.1} parent=11 // pred_check_branch
          %255 = sbr.rel (%p253) target = $region16
        $region15: #{_lambda_.1} parent=11 // pred_region
          _
        $region16: #{_lambda_.1} parent=11 // pred_fallthru
          _
        // Predicated region
        $region17: #{_lambda_.1} parent=11 // pred_check
          %p256 = pneg %p86
        $region18: #{_lambda_.1} parent=11 // pred_check_branch
          %258 = sbr.rel (%p256) target = $region20
        $region19: #{_lambda_.1} parent=11 // pred_region
          _
        $region20: #{_lambda_.1} parent=11 // pred_fallthru
          _
        // Predicated region
        $region21: #{_lambda_.1} parent=11 // pred_check
          %p259 = pneg %p107
        $region22: #{_lambda_.1} parent=11 // pred_check_branch
          %261 = sbr.rel (%p259) target = $region24
        $region23: #{_lambda_.1} parent=11 // pred_region
          _
        $region24: #{_lambda_.1} parent=11 // pred_fallthru
          _
        // Predicated region
        $region25: #{_lambda_.1} parent=11 // pred_check
          %p262 = pneg %p128
        $region26: #{_lambda_.1} parent=11 // pred_check_branch
          %264 = sbr.rel (%p262) target = $region28
        $region27: #{_lambda_.1} parent=11 // pred_region
          _
        $region28: #{_lambda_.1} parent=11 // pred_fallthru
          _
        // Predicated region
        $region29: #{_lambda_.1} parent=11 // pred_check
          %p265 = pneg %p149
        $region30: #{_lambda_.1} parent=11 // pred_check_branch
          %267 = sbr.rel (%p265) target = $region32
        $region31: #{_lambda_.1} parent=11 // pred_region
          _
        $region32: #{_lambda_.1} parent=11 // pred_fallthru
          _
        // Predicated region
        $region33: #{_lambda_.1} parent=11 // pred_check
          %p268 = pneg %p170
        $region34: #{_lambda_.1} parent=11 // pred_check_branch
          %270 = sbr.rel (%p268) target = $region36
        $region35: #{_lambda_.1} parent=11 // pred_region
          _
        $region36: #{_lambda_.1} parent=11 // pred_fallthru
          _
        // Predicated region
        $region37: #{_lambda_.1} parent=11 // pred_check
          %p271 = pneg %p191
        $region38: #{_lambda_.1} parent=11 // pred_check_branch
          %273 = sbr.rel (%p271) target = $region40
        $region39: #{_lambda_.1} parent=11 // pred_region
          _
        $region40: #{_lambda_.1} parent=11 // pred_fallthru
          _
        // Predicated region
        $region41: #{_lambda_.1} parent=11 // pred_check
          %p274 = pneg %p212
        $region42: #{_lambda_.1} parent=11 // pred_check_branch
          %276 = sbr.rel (%p274) target = $region44
        $region43: #{_lambda_.1} parent=11 // pred_region
          _
        $region44: #{_lambda_.1} parent=11 // pred_fallthru
          _
      $region12: #{_lambda_.1} parent=5 // pred_fallthru
        _
      %p277 = scmp.lt.s32.totalorder %s18, 2
      // Predicated region
      $region45: #{_lambda_.1} parent=5 // pred_check
        %p278 = pneg %p277
      $region46: #{_lambda_.1} parent=5 // pred_check_branch
        %280 = sbr.rel (%p278) target = $region48
      $region47: #{_lambda_.1} parent=5 // pred_region
        // Predicated region
        $region49: #{_lambda_.1} parent=47 // pred_check
          %p281 = pneg %p38
        $region50: #{_lambda_.1} parent=47 // pred_check_branch
          %283 = sbr.rel (%p281) target = $region52
        $region51: #{_lambda_.1} parent=47 // pred_region
          %s284 = smul.u32 4, %s18
          %p285 = scmp.lt.s32.totalorder %s284, 7
          %s286 = scalar_select %p285, %s284, 7
          %s287 = smul.addr %s286, 3
          %s288 = smul.addr %s287, 8
          %s289 = scalar_lea.vmem %s0, %s288
          %s290 = smul.u32 4, %s18
        $region52: #{_lambda_.1} parent=47 // pred_fallthru
          _
      $region48: #{_lambda_.1} parent=5 // pred_fallthru
        _
      %p291 = scmp.le.s32.totalorder 1, %s18
      %p292 = scmp.lt.s32.totalorder %s18, 3
      %p293 = pnand %p291, %p292
      %p294 = pneg %p293
      // Predicated region
      $region53: #{_lambda_.1} parent=5 // pred_check
        _
      $region54: #{_lambda_.1} parent=5 // pred_check_branch
        %296 = sbr.rel (%p293) target = $region56
      $region55: #{_lambda_.1} parent=5 // pred_region
        %s297 = ssub.s32 %s18, 1
        %s298 = smul.u32 4, %s23
        %p299 = scmp.lt.s32.totalorder %s298, 7
        %s300 = scalar_select %p299, %s298, 7
        %s301 = smul.addr %s300, 3
        %s302 = smul.addr %s301, 8
        %s303 = scalar_lea.vmem %s0, %s302
        %p304 = pneg %p44
        %p305 = pneg %p41
        %p306 = pneg %p65
        %p307 = pneg %p62
        %p308 = pneg %p86
        %p309 = pneg %p83
        %p310 = pneg %p107
        %p311 = pneg %p104
        %p312 = pneg %p128
        %p313 = pneg %p125
        %p314 = pneg %p149
        %p315 = pneg %p146
        %p316 = pneg %p170
        %p317 = pneg %p167
        %p318 = pneg %p191
        %p319 = pneg %p188
        %p320 = pneg %p212
        %p321 = pneg %p209
        %p322 = pneg %p238
        %p323 = pneg %p235
        %s324 = sand.u32 %s225, 1
        %s325 = scalar_lea.sflag [#allocation5], %s324
        %s326 = sand.u32 %s225, 1
        %s327 = smul.addr %s326, 4
        %s328 = scalar_lea.vmem [#allocation4], %s327
        %s329 = smul.u32 4, %s23
        %p330 = scmp.lt.s32.totalorder %s329, 7
        %s331 = scalar_select %p330, %s329, 7
        %s332 = smul.addr %s331, 3
        %s333 = smul.addr %s332, 8
        %s334 = scalar_lea.vmem %s0, %s333
        %s335 = smul.u32 4, %s23
        %v336 = vld [vmem:[%s334] ss:$2 sm:$0xff]
        %s337 = scalar_lea.vmem %s334, 24
        %v338 = vld [vmem:[%s337] ss:$2 sm:$0xff]
        %s339 = scalar_lea.vmem %s334, 48
        %v340 = vld [vmem:[%s339] ss:$2 sm:$0xff]
        %s341 = scalar_lea.vmem %s334, 72
        %v342 = vld [vmem:[%s341] ss:$2 sm:$0xff]
        %s343 = scalar_lea.vmem %s334, 1
        %v344 = vld [vmem:[%s343] ss:$2 sm:$0xff]
        %s345 = scalar_lea.vmem %s334, 25
        %v346 = vld [vmem:[%s345] ss:$2 sm:$0xff]
        %s347 = scalar_lea.vmem %s334, 49
        %v348 = vld [vmem:[%s347] ss:$2 sm:$0xff]
        %s349 = scalar_lea.vmem %s334, 73
        %v350 = vld [vmem:[%s349] ss:$2 sm:$0xff]
        %s351 = scalar_lea.vmem %s334, 2
        %v352 = vld [vmem:[%s351] ss:$2 sm:$0xff]
        %s353 = scalar_lea.vmem %s334, 26
        %v354 = vld [vmem:[%s353] ss:$2 sm:$0xff]
        %s355 = scalar_lea.vmem %s334, 50
        %v356 = vld [vmem:[%s355] ss:$2 sm:$0xff]
        %s357 = scalar_lea.vmem %s334, 74
        %v358 = vld [vmem:[%s357] ss:$2 sm:$0xff]
        %363 = vrot.lane.b32.xlu0 %v344, 64
        %v364 = vpop.permute.xlu0 %363
        %365 = vrot.lane.b32.xlu0 %v346, 64
        %v366 = vpop.permute.xlu0 %365
        %367 = vrot.lane.b32.xlu0 %v348, 64
        %v368 = vpop.permute.xlu0 %367
        %369 = vrot.lane.b32.xlu0 %v350, 64
        %v370 = vpop.permute.xlu0 %369
        %vm375 = vcmask 523264
        %v376 = vsel %vm375, %v336, %v364
        %v377 = vsel %vm375, %v338, %v366
        %v378 = vsel %vm375, %v340, %v368
        %v379 = vsel %vm375, %v342, %v370
        %v380 = vld [vmem:[%s1] sm:$0xff]
        %v381 = vld [vmem:[%s1 + $0x8] sm:$0xff]
        %v382 = vld [vmem:[%s1 + $0x10] sm:$0xff]
        %v383 = vld [vmem:[%s1 + $0x18] sm:$0xff]
        %v384 = vld [vmem:[%s1 + $0x20] sm:$0xff]
        %v385 = vld [vmem:[%s1 + $0x28] sm:$0xff]
        %v386 = vld [vmem:[%s1 + $0x30] sm:$0xff]
        %v387 = vld [vmem:[%s1 + $0x38] sm:$0xff]
        %v388 = vld [vmem:[%s1 + $0x40] sm:$0xff]
        %v389 = vld [vmem:[%s1 + $0x48] sm:$0xff]
        %v390 = vld [vmem:[%s1 + $0x50] sm:$0xff]
        %v391 = vld [vmem:[%s1 + $0x58] sm:$0xff]
        %v392 = vld [vmem:[%s1 + $0x60] sm:$0xff]
        %v393 = vld [vmem:[%s1 + $0x68] sm:$0xff]
        %v394 = vld [vmem:[%s1 + $0x70] sm:$0xff]
        %v395 = vld [vmem:[%s1 + $0x78] sm:$0xff]
        %v396 = vld [vmem:[%s1 + $0x80] sm:$0xff]
        %v397 = vld [vmem:[%s1 + $0x88] sm:$0xff]
        %v398 = vld [vmem:[%s1 + $0x90] sm:$0xff]
        %v399 = vld [vmem:[%s1 + $0x98] sm:$0xff]
        %v400 = vld [vmem:[%s1 + $0xa0] sm:$0xff]
        %v401 = vld [vmem:[%s1 + $0xa8] sm:$0xff]
        %v402 = vld [vmem:[%s1 + $0xb0] sm:$0xff]
        %v403 = vld [vmem:[%s1 + $0xb8] sm:$0xff]
        %v404 = vld [vmem:[%s2] sm:$0x1]
        %v406 = vperm.slane %v404, 0
        %v409 = vsel %vm375, %v352, 0
        %v412 = vsel %vm375, %v354, 0
        %v415 = vsel %vm375, %v356, 0
        %v418 = vsel %vm375, %v358, 0
        %420 = vmatpush.msra.mxu0 %v395
        %421 = vmatpush.msra.mxu0 %v394
        %422 = vmatpush.msra.mxu0 %v393
        %423 = vmatpush.msra.mxu0 %v392
        %424 = vmatpush.msra.mxu0 %v391
        %425 = vmatpush.msra.mxu0 %v390
        %426 = vmatpush.msra.mxu0 %v389
        %427 = vmatpush.msra.mxu0 %v388
        %428 = vmatpush.msra.mxu0 %v387
        %429 = vmatpush.msra.mxu0 %v386
        %430 = vmatpush.msra.mxu0 %v385
        %431 = vmatpush.msra.mxu0 %v384
        %432 = vmatpush.msra.mxu0 %v383
        %433 = vmatpush.msra.mxu0 %v382
        %434 = vmatpush.msra.mxu0 %v381
        %435 = vmatpush.msra.mxu0 %v380
        %436 = vmatmul.f32.gmra.mxu0 %v376
        %v437 = vpop.f32.mrf.mxu0
        %v438 = vadd.f32 %v406, %v437
        %439 = vmatmul.f32.gmra.mxu0 %v377
        %v440 = vpop.f32.mrf.mxu0
        %v441 = vadd.f32 %v406, %v440
        %442 = vmatmul.f32.gmra.mxu0 %v378
        %v443 = vpop.f32.mrf.mxu0
        %v444 = vadd.f32 %v406, %v443
        %445 = vmatmul.f32.gmra.mxu0 %v379
        %v446 = vpop.f32.mrf.mxu0
        %v447 = vadd.f32 %v406, %v446
        %448 = vdwg.mxu0
        %449 = vmatpush.msra.mxu0 0.0
        %450 = vmatpush.msra.mxu0 0.0
        %451 = vmatpush.msra.mxu0 0.0
        %452 = vmatpush.msra.mxu0 0.0
        %453 = vmatpush.msra.mxu0 0.0
        %454 = vmatpush.msra.mxu0 0.0
        %455 = vmatpush.msra.mxu0 0.0
        %456 = vmatpush.msra.mxu0 0.0
        %457 = vmatpush.msra.mxu0 %v403
        %458 = vmatpush.msra.mxu0 %v402
        %459 = vmatpush.msra.mxu0 %v401
        %460 = vmatpush.msra.mxu0 %v400
        %461 = vmatpush.msra.mxu0 %v399
        %462 = vmatpush.msra.mxu0 %v398
        %463 = vmatpush.msra.mxu0 %v397
        %464 = vmatpush.msra.mxu0 %v396
        %465 = vmatmul.f32.gmra.mxu0 %v409
        %v466 = vpop.f32.mrf.mxu0
        %v467 = vadd.f32 %v438, %v466
        %468 = vmatmul.f32.gmra.mxu0 %v412
        %v469 = vpop.f32.mrf.mxu0
        %v470 = vadd.f32 %v441, %v469
        %471 = vmatmul.f32.gmra.mxu0 %v415
        %v472 = vpop.f32.mrf.mxu0
        %v473 = vadd.f32 %v444, %v472
        %474 = vmatmul.f32.gmra.mxu0 %v418
        %v475 = vpop.f32.mrf.mxu0
        %v476 = vadd.f32 %v447, %v475
        %477 = vdwg.mxu0
        %vm478 = vcmp.ge.f32.partialorder %v467, 0.0
        %vm479 = vcmp.ge.f32.partialorder %v470, 0.0
        %vm480 = vcmp.ge.f32.partialorder %v473, 0.0
        %vm481 = vcmp.ge.f32.partialorder %v476, 0.0
        %v482 = vmul.f32 %v467, 0.1
        %v483 = vmul.f32 %v470, 0.1
        %v484 = vmul.f32 %v473, 0.1
        %v485 = vmul.f32 %v476, 0.1
        %v486 = vsel %vm478, %v467, %v482
        %v487 = vsel %vm479, %v470, %v483
        %v488 = vsel %vm480, %v473, %v484
        %v489 = vsel %vm481, %v476, %v485
        %490 = vst [vmem:[#allocation2] sm:$0x1] 0.0
        %491 = vst [vmem:[#allocation2 + $0x10] sm:$0x1] 0.0
        %492 = vst [vmem:[#allocation2 + $0x20] sm:$0x1] 0.0
        %493 = vst [vmem:[#allocation2 + $0x30] sm:$0x1] 0.0
        %494 = vst [vmem:[#allocation2 + $0x9] sm:$0x1] 0.0
        %495 = vst [vmem:[#allocation2 + $0x19] sm:$0x1] 0.0
        %496 = vst [vmem:[#allocation2 + $0x29] sm:$0x1] 0.0
        %497 = vst [vmem:[#allocation2 + $0x39] sm:$0x1] 0.0
        %498 = vst [vmem:[#allocation2 + $0x1] sm:$0xff] %v486
        %s499 = scalar_lea.vmem [#allocation2], 16
        %500 = vst [vmem:[%s499 + $0x1] sm:$0xff] %v487
        %s501 = scalar_lea.vmem [#allocation2], 32
        %502 = vst [vmem:[%s501 + $0x1] sm:$0xff] %v488
        %s503 = scalar_lea.vmem [#allocation2], 48
        %504 = vst [vmem:[%s503 + $0x1] sm:$0xff] %v489
        %v505 = vld [vmem:[#allocation2] ss:$2 sm:$0xf]
        %s506 = scalar_lea.vmem [#allocation2], 16
        %v507 = vld [vmem:[%s506] ss:$2 sm:$0xf]
        %s508 = scalar_lea.vmem [#allocation2], 32
        %v509 = vld [vmem:[%s508] ss:$2 sm:$0xf]
        %s510 = scalar_lea.vmem [#allocation2], 48
        %v511 = vld [vmem:[%s510] ss:$2 sm:$0xf]
        %s512 = scalar_lea.vmem [#allocation2], 1
        %v513 = vld [vmem:[%s512] ss:$2 sm:$0xf]
        %s514 = scalar_lea.vmem [#allocation2], 17
        %v515 = vld [vmem:[%s514] ss:$2 sm:$0xf]
        %s516 = scalar_lea.vmem [#allocation2], 33
        %v517 = vld [vmem:[%s516] ss:$2 sm:$0xf]
        %s518 = scalar_lea.vmem [#allocation2], 49
        %v519 = vld [vmem:[%s518] ss:$2 sm:$0xf]
        %s520 = scalar_lea.vmem [#allocation2], 2
        %v521 = vld [vmem:[%s520] ss:$2 sm:$0xf]
        %s522 = scalar_lea.vmem [#allocation2], 18
        %v523 = vld [vmem:[%s522] ss:$2 sm:$0xf]
        %s524 = scalar_lea.vmem [#allocation2], 34
        %v525 = vld [vmem:[%s524] ss:$2 sm:$0xf]
        %s526 = scalar_lea.vmem [#allocation2], 50
        %v527 = vld [vmem:[%s526] ss:$2 sm:$0xf]
        %v540 = vrot.slane %v513, 4
        %v541 = vrot.slane %v515, 4
        %v542 = vrot.slane %v517, 4
        %v543 = vrot.slane %v519, 4
        %vm544 = vcmask 1043456
        %v545 = vsel %vm544, %v505, %v540
        %v546 = vsel %vm544, %v507, %v541
        %v547 = vsel %vm544, %v509, %v542
        %v548 = vsel %vm544, %v511, %v543
        %v549 = vld [vmem:[%s3] sm:$0xff]
        %v550 = vld [vmem:[%s3 + $0x8] sm:$0xff]
        %v551 = vld [vmem:[%s3 + $0x10] sm:$0xff]
        %v552 = vld [vmem:[%s3 + $0x18] sm:$0xff]
        %v553 = vld [vmem:[%s3 + $0x20] sm:$0xff]
        %v554 = vld [vmem:[%s3 + $0x28] sm:$0xff]
        %v555 = vld [vmem:[%s3 + $0x30] sm:$0xff]
        %v556 = vld [vmem:[%s3 + $0x38] sm:$0xff]
        %v557 = vld [vmem:[%s3 + $0x40] sm:$0xff]
        %v558 = vld [vmem:[%s3 + $0x48] sm:$0xff]
        %v559 = vld [vmem:[%s3 + $0x50] sm:$0xff]
        %v560 = vld [vmem:[%s3 + $0x58] sm:$0xff]
        %v561 = vld [vmem:[%s3 + $0x60] sm:$0xff]
        %v562 = vld [vmem:[%s3 + $0x68] sm:$0xff]
        %v563 = vld [vmem:[%s3 + $0x70] sm:$0xff]
        %v564 = vld [vmem:[%s3 + $0x78] sm:$0xff]
        %v565 = vld [vmem:[%s3 + $0x80] sm:$0xff]
        %v566 = vld [vmem:[%s3 + $0x88] sm:$0xff]
        %v567 = vld [vmem:[%s3 + $0x90] sm:$0xff]
        %v568 = vld [vmem:[%s3 + $0x98] sm:$0xff]
        %v569 = vld [vmem:[%s3 + $0xa0] sm:$0xff]
        %v570 = vld [vmem:[%s3 + $0xa8] sm:$0xff]
        %v571 = vld [vmem:[%s3 + $0xb0] sm:$0xff]
        %v572 = vld [vmem:[%s3 + $0xb8] sm:$0xff]
        %v573 = vld [vmem:[%s3 + $0xc0] sm:$0xff]
        %v574 = vld [vmem:[%s3 + $0xc8] sm:$0xff]
        %v575 = vld [vmem:[%s3 + $0xd0] sm:$0xff]
        %v576 = vld [vmem:[%s3 + $0xd8] sm:$0xff]
        %v577 = vld [vmem:[%s3 + $0xe0] sm:$0xff]
        %v578 = vld [vmem:[%s3 + $0xe8] sm:$0xff]
        %v579 = vld [vmem:[%s3 + $0xf0] sm:$0xff]
        %v580 = vld [vmem:[%s3 + $0xf8] sm:$0xff]
        %v581 = vld [vmem:[%s3 + $0x100] sm:$0xff]
        %v582 = vld [vmem:[%s3 + $0x108] sm:$0xff]
        %v583 = vld [vmem:[%s3 + $0x110] sm:$0xff]
        %v584 = vld [vmem:[%s3 + $0x118] sm:$0xff]
        %v585 = vld [vmem:[%s3 + $0x120] sm:$0xff]
        %v586 = vld [vmem:[%s3 + $0x128] sm:$0xff]
        %v587 = vld [vmem:[%s3 + $0x130] sm:$0xff]
        %v588 = vld [vmem:[%s3 + $0x138] sm:$0xff]
        %v589 = vld [vmem:[%s3 + $0x140] sm:$0xff]
        %v590 = vld [vmem:[%s3 + $0x148] sm:$0xff]
        %v591 = vld [vmem:[%s3 + $0x150] sm:$0xff]
        %v592 = vld [vmem:[%s3 + $0x158] sm:$0xff]
        %v593 = vld [vmem:[%s3 + $0x160] sm:$0xff]
        %v594 = vld [vmem:[%s3 + $0x168] sm:$0xff]
        %v595 = vld [vmem:[%s3 + $0x170] sm:$0xff]
        %v596 = vld [vmem:[%s3 + $0x178] sm:$0xff]
        %v597 = vld [vmem:[%s4] sm:$0x1]
        %v599 = vperm.slane %v597, 0
        %601 = vst [vmem:[#allocation1] ss:$2 sm:$0xff] %v545
        %s602 = scalar_lea.vmem [#allocation1], 1
        %603 = vst [vmem:[%s602] ss:$2 sm:$0xff] %v546
        %s604 = scalar_lea.vmem [#allocation1], 16
        %605 = vst [vmem:[%s604] ss:$2 sm:$0xff] %v521
        %s606 = scalar_lea.vmem [#allocation1], 17
        %607 = vst [vmem:[%s606] ss:$2 sm:$0xff] %v523
        %s608 = scalar_lea.vmem [#allocation1], 32
        %609 = vst [vmem:[%s608] ss:$2 sm:$0xff] %v547
        %s610 = scalar_lea.vmem [#allocation1], 33
        %611 = vst [vmem:[%s610] ss:$2 sm:$0xff] %v548
        %s612 = scalar_lea.vmem [#allocation1], 48
        %613 = vst [vmem:[%s612] ss:$2 sm:$0xff] %v525
        %s614 = scalar_lea.vmem [#allocation1], 49
        %615 = vst [vmem:[%s614] ss:$2 sm:$0xff] %v527
        %v616 = vld.sshfl [vmem:[#allocation1] sm:$0xff pattern:$0x75316420]
        %v617 = vld.sshfl [vmem:[#allocation1 + $0x8] sm:$0xff pattern:$0x75316420]
        %v618 = vld.sshfl [vmem:[#allocation1 + $0x10] sm:$0xff pattern:$0x75316420]
        %v619 = vld.sshfl [vmem:[#allocation1 + $0x20] sm:$0xff pattern:$0x75316420]
        %v620 = vld.sshfl [vmem:[#allocation1 + $0x28] sm:$0xff pattern:$0x75316420]
        %v621 = vld.sshfl [vmem:[#allocation1 + $0x30] sm:$0xff pattern:$0x75316420]
        %628 = vmatpush.msra.mxu0 %v564
        %629 = vmatpush.msra.mxu0 %v563
        %630 = vmatpush.msra.mxu0 %v562
        %631 = vmatpush.msra.mxu0 %v561
        %632 = vmatpush.msra.mxu0 %v560
        %633 = vmatpush.msra.mxu0 %v559
        %634 = vmatpush.msra.mxu0 %v558
        %635 = vmatpush.msra.mxu0 %v557
        %636 = vmatpush.msra.mxu0 %v556
        %637 = vmatpush.msra.mxu0 %v555
        %638 = vmatpush.msra.mxu0 %v554
        %639 = vmatpush.msra.mxu0 %v553
        %640 = vmatpush.msra.mxu0 %v552
        %641 = vmatpush.msra.mxu0 %v551
        %642 = vmatpush.msra.mxu0 %v550
        %643 = vmatpush.msra.mxu0 %v549
        %644 = vmatmul.f32.gmra.mxu0 %v616
        %v645 = vpop.f32.mrf.mxu0
        %v646 = vadd.f32 %v599, %v645
        %647 = vmatmul.f32.gmra.mxu0 %v619
        %v648 = vpop.f32.mrf.mxu0
        %v649 = vadd.f32 %v599, %v648
        %650 = vdwg.mxu0
        %651 = vmatpush.msra.mxu0 %v580
        %652 = vmatpush.msra.mxu0 %v579
        %653 = vmatpush.msra.mxu0 %v578
        %654 = vmatpush.msra.mxu0 %v577
        %655 = vmatpush.msra.mxu0 %v576
        %656 = vmatpush.msra.mxu0 %v575
        %657 = vmatpush.msra.mxu0 %v574
        %658 = vmatpush.msra.mxu0 %v573
        %659 = vmatpush.msra.mxu0 %v572
        %660 = vmatpush.msra.mxu0 %v571
        %661 = vmatpush.msra.mxu0 %v570
        %662 = vmatpush.msra.mxu0 %v569
        %663 = vmatpush.msra.mxu0 %v568
        %664 = vmatpush.msra.mxu0 %v567
        %665 = vmatpush.msra.mxu0 %v566
        %666 = vmatpush.msra.mxu0 %v565
        %667 = vmatmul.f32.gmra.mxu0 %v617
        %v668 = vpop.f32.mrf.mxu0
        %v669 = vadd.f32 %v646, %v668
        %670 = vmatmul.f32.gmra.mxu0 %v620
        %v671 = vpop.f32.mrf.mxu0
        %v672 = vadd.f32 %v649, %v671
        %673 = vdwg.mxu0
        %674 = vmatpush.msra.mxu0 %v596
        %675 = vmatpush.msra.mxu0 %v595
        %676 = vmatpush.msra.mxu0 %v594
        %677 = vmatpush.msra.mxu0 %v593
        %678 = vmatpush.msra.mxu0 %v592
        %679 = vmatpush.msra.mxu0 %v591
        %680 = vmatpush.msra.mxu0 %v590
        %681 = vmatpush.msra.mxu0 %v589
        %682 = vmatpush.msra.mxu0 %v588
        %683 = vmatpush.msra.mxu0 %v587
        %684 = vmatpush.msra.mxu0 %v586
        %685 = vmatpush.msra.mxu0 %v585
        %686 = vmatpush.msra.mxu0 %v584
        %687 = vmatpush.msra.mxu0 %v583
        %688 = vmatpush.msra.mxu0 %v582
        %689 = vmatpush.msra.mxu0 %v581
        %690 = vmatmul.f32.gmra.mxu0 %v618
        %v691 = vpop.f32.mrf.mxu0
        %v692 = vadd.f32 %v669, %v691
        %693 = vmatmul.f32.gmra.mxu0 %v621
        %v694 = vpop.f32.mrf.mxu0
        %v695 = vadd.f32 %v672, %v694
        %696 = vdwg.mxu0
        %vm697 = vcmp.ge.f32.partialorder %v692, 0.0
        %vm698 = vcmp.ge.f32.partialorder %v695, 0.0
        %v699 = vmul.f32 %v692, 0.1
        %v700 = vmul.f32 %v695, 0.1
        %v701 = vsel %vm697, %v692, %v699
        %v702 = vsel %vm698, %v695, %v700
        %vm703 = vcmask 516096
        %704 = vst.msk [vmem:[#allocation3] sm:$0x1] %vm703, 0.0
        %705 = vst.msk [vmem:[#allocation3 + $0x8] sm:$0x1] %vm703, 0.0
        %706 = vst.msk [vmem:[#allocation3 + $0x10] sm:$0x1] %vm703, 0.0
        %707 = vst.msk [vmem:[#allocation3 + $0x18] sm:$0x1] %vm703, 0.0
        %708 = vst.msk [vmem:[#allocation3 + $0x5] sm:$0x1] %vm703, 0.0
        %709 = vst.msk [vmem:[#allocation3 + $0xd] sm:$0x1] %vm703, 0.0
        %710 = vst.msk [vmem:[#allocation3 + $0x15] sm:$0x1] %vm703, 0.0
        %711 = vst.msk [vmem:[#allocation3 + $0x1d] sm:$0x1] %vm703, 0.0
        %vm712 = vcmask 519168
        %713 = vst.msk [vmem:[#allocation3 + $0x1] sm:$0xf] %vm712, %v701
        %s714 = scalar_lea.vmem [#allocation3], 8
        %vm715 = vcmask 523268
        %716 = vst.msk [vmem:[%s714 - $0x3] sm:$0xf0] %vm715, %v701
        %s717 = scalar_lea.vmem [#allocation3], 16
        %718 = vst.msk [vmem:[%s717 + $0x1] sm:$0xf] %vm712, %v702
        %s719 = scalar_lea.vmem [#allocation3], 24
        %720 = vst.msk [vmem:[%s719 - $0x3] sm:$0xf0] %vm715, %v702
        %v721 = vld [vmem:[#allocation3] ss:$2 sm:$0x3]
        %s722 = scalar_lea.vmem [#allocation3], 8
        %v723 = vld [vmem:[%s722] ss:$2 sm:$0x3]
        %s724 = scalar_lea.vmem [#allocation3], 16
        %v725 = vld [vmem:[%s724] ss:$2 sm:$0x3]
        %s726 = scalar_lea.vmem [#allocation3], 24
        %v727 = vld [vmem:[%s726] ss:$2 sm:$0x3]
        %s728 = scalar_lea.vmem [#allocation3], 1
        %v729 = vld [vmem:[%s728] ss:$2 sm:$0x3]
        %s730 = scalar_lea.vmem [#allocation3], 9
        %v731 = vld [vmem:[%s730] ss:$2 sm:$0x3]
        %s732 = scalar_lea.vmem [#allocation3], 17
        %v733 = vld [vmem:[%s732] ss:$2 sm:$0x3]
        %s734 = scalar_lea.vmem [#allocation3], 25
        %v735 = vld [vmem:[%s734] ss:$2 sm:$0x3]
        %s736 = scalar_lea.vmem [#allocation3], 2
        %v737 = vld [vmem:[%s736] ss:$2 sm:$0x3]
        %s738 = scalar_lea.vmem [#allocation3], 10
        %v739 = vld [vmem:[%s738] ss:$2 sm:$0x3]
        %s740 = scalar_lea.vmem [#allocation3], 18
        %v741 = vld [vmem:[%s740] ss:$2 sm:$0x3]
        %s742 = scalar_lea.vmem [#allocation3], 26
        %v743 = vld [vmem:[%s742] ss:$2 sm:$0x3]
        %748 = vrot.lane.b32.xlu0 %v729, 64
        %v749 = vpop.permute.xlu0 %748
        %750 = vrot.lane.b32.xlu0 %v731, 64
        %v751 = vpop.permute.xlu0 %750
        %752 = vrot.lane.b32.xlu0 %v733, 64
        %v753 = vpop.permute.xlu0 %752
        %754 = vrot.lane.b32.xlu0 %v735, 64
        %v755 = vpop.permute.xlu0 %754
        %v760 = vsel %vm375, %v721, %v749
        %v761 = vsel %vm375, %v723, %v751
        %v762 = vsel %vm375, %v725, %v753
        %v763 = vsel %vm375, %v727, %v755
        %v772 = vrot.slane %v737, 6
        %v773 = vrot.slane %v739, 6
        %v774 = vrot.slane %v741, 6
        %v775 = vrot.slane %v743, 6
        %vm776 = vcmask 1041408
        %v777 = vsel %vm776, %v760, %v772
        %v778 = vsel %vm776, %v761, %v773
        %v779 = vsel %vm776, %v762, %v774
        %v780 = vsel %vm776, %v763, %v775
        %v781 = vld [vmem:[%s5] sm:$0xff]
        %v782 = vld [vmem:[%s5 + $0x8] sm:$0xff]
        %v783 = vld [vmem:[%s5 + $0x10] sm:$0xff]
        %v784 = vld [vmem:[%s5 + $0x18] sm:$0xff]
        %v785 = vld [vmem:[%s5 + $0x20] sm:$0xff]
        %v786 = vld [vmem:[%s5 + $0x28] sm:$0xff]
        %v787 = vld [vmem:[%s5 + $0x30] sm:$0xff]
        %v788 = vld [vmem:[%s5 + $0x38] sm:$0xff]
        %v789 = vld [vmem:[%s5 + $0x40] sm:$0xff]
        %v790 = vld [vmem:[%s5 + $0x48] sm:$0xff]
        %v791 = vld [vmem:[%s5 + $0x50] sm:$0xff]
        %v792 = vld [vmem:[%s5 + $0x58] sm:$0xff]
        %v793 = vld [vmem:[%s5 + $0x60] sm:$0xff]
        %v794 = vld [vmem:[%s5 + $0x68] sm:$0xff]
        %v795 = vld [vmem:[%s5 + $0x70] sm:$0xff]
        %v796 = vld [vmem:[%s5 + $0x78] sm:$0xff]
        %v797 = vld [vmem:[%s5 + $0x80] sm:$0xff]
        %v798 = vld [vmem:[%s5 + $0x88] sm:$0xff]
        %v799 = vld [vmem:[%s5 + $0x90] sm:$0xff]
        %v800 = vld [vmem:[%s5 + $0x98] sm:$0xff]
        %v801 = vld [vmem:[%s5 + $0xa0] sm:$0xff]
        %v802 = vld [vmem:[%s5 + $0xa8] sm:$0xff]
        %v803 = vld [vmem:[%s5 + $0xb0] sm:$0xff]
        %v804 = vld [vmem:[%s5 + $0xb8] sm:$0xff]
        %v805 = vld [vmem:[%s6] sm:$0x1]
        %v807 = vperm.slane %v805, 0
        %809 = vst [vmem:[#allocation1] ss:$4 sm:$0xff] %v777
        %s810 = scalar_lea.vmem [#allocation1], 1
        %811 = vst [vmem:[%s810] ss:$4 sm:$0xff] %v778
        %s812 = scalar_lea.vmem [#allocation1], 2
        %813 = vst [vmem:[%s812] ss:$4 sm:$0xff] %v779
        %s814 = scalar_lea.vmem [#allocation1], 3
        %815 = vst [vmem:[%s814] ss:$4 sm:$0xff] %v780
        %v816 = vld.sshfl [vmem:[#allocation1] sm:$0xff pattern:$0x73625140]
        %v817 = vld.sshfl [vmem:[#allocation1 + $0x8] sm:$0xff pattern:$0x73625140]
        %v819 = vsel %vm375, %v817, 0
        %821 = vmatpush.msra.mxu0 %v796
        %822 = vmatpush.msra.mxu0 %v795
        %823 = vmatpush.msra.mxu0 %v794
        %824 = vmatpush.msra.mxu0 %v793
        %825 = vmatpush.msra.mxu0 %v792
        %826 = vmatpush.msra.mxu0 %v791
        %827 = vmatpush.msra.mxu0 %v790
        %828 = vmatpush.msra.mxu0 %v789
        %829 = vmatpush.msra.mxu0 %v788
        %830 = vmatpush.msra.mxu0 %v787
        %831 = vmatpush.msra.mxu0 %v786
        %832 = vmatpush.msra.mxu0 %v785
        %833 = vmatpush.msra.mxu0 %v784
        %834 = vmatpush.msra.mxu0 %v783
        %835 = vmatpush.msra.mxu0 %v782
        %836 = vmatpush.msra.mxu0 %v781
        %837 = vmatmul.f32.gmra.mxu0 %v816
        %v838 = vpop.f32.mrf.mxu0
        %v839 = vadd.f32 %v807, %v838
        %840 = vdwg.mxu0
        %841 = vmatpush.msra.mxu0 0.0
        %842 = vmatpush.msra.mxu0 0.0
        %843 = vmatpush.msra.mxu0 0.0
        %844 = vmatpush.msra.mxu0 0.0
        %845 = vmatpush.msra.mxu0 0.0
        %846 = vmatpush.msra.mxu0 0.0
        %847 = vmatpush.msra.mxu0 0.0
        %848 = vmatpush.msra.mxu0 0.0
        %849 = vmatpush.msra.mxu0 %v804
        %850 = vmatpush.msra.mxu0 %v803
        %851 = vmatpush.msra.mxu0 %v802
        %852 = vmatpush.msra.mxu0 %v801
        %853 = vmatpush.msra.mxu0 %v800
        %854 = vmatpush.msra.mxu0 %v799
        %855 = vmatpush.msra.mxu0 %v798
        %856 = vmatpush.msra.mxu0 %v797
        %857 = vmatmul.f32.gmra.mxu0 %v819
        %v858 = vpop.f32.mrf.mxu0
        %v859 = vadd.f32 %v839, %v858
        %860 = vdwg.mxu0
        %vm861 = vcmp.ge.f32.partialorder %v859, 0.0
        %v862 = vmul.f32 %v859, 0.1
        %v863 = vsel %vm861, %v859, %v862
        %v864 = vld [vmem:[%s7] sm:$0xf]
        %vm865 = vcmask 64512
        %v867 = vsel %vm865, %v864, 0
        %869 = vmatpush.msra.mxu0 0.0
        %870 = vmatpush.msra.mxu0 0.0
        %871 = vmatpush.msra.mxu0 0.0
        %872 = vmatpush.msra.mxu0 0.0
        %873 = vmatpush.msra.mxu0 0.0
        %874 = vmatpush.msra.mxu0 0.0
        %875 = vmatpush.msra.mxu0 0.0
        %876 = vmatpush.msra.mxu0 0.0
        %877 = vmatpush.msra.mxu0 0.0
        %878 = vmatpush.msra.mxu0 0.0
        %879 = vmatpush.msra.mxu0 0.0
        %880 = vmatpush.msra.mxu0 0.0
        %881 = vmatpush.msra.mxu0 0.0
        %882 = vmatpush.msra.mxu0 0.0
        %883 = vmatpush.msra.mxu0 0.0
        %884 = vmatpush.msra.mxu0 %v863
        %885 = vmatmul.f32.gmra.mxu0 %v867
        %v886 = vpop.f32.mrf.mxu0
        %v887 = vadd.f32 0.0, %v886
        %888 = vdwg.mxu0
        %v889 = vld [vmem:[%s8] sm:$0xff]
        %v890 = vld [vmem:[%s8 + $0x8] sm:$0xff]
        %v891 = vld [vmem:[%s8 + $0x10] sm:$0xff]
        %v892 = vld [vmem:[%s8 + $0x18] sm:$0xff]
        %v893 = vld [vmem:[%s8 + $0x20] sm:$0xff]
        %v894 = vld [vmem:[%s8 + $0x28] sm:$0xff]
        %v895 = vld [vmem:[%s8 + $0x30] sm:$0xff]
        %v896 = vld [vmem:[%s8 + $0x38] sm:$0xff]
        %v898 = vsel %vm375, %v887, 0
        %900 = vmatpush.msra.mxu0 0.0
        %901 = vmatpush.msra.mxu0 0.0
        %902 = vmatpush.msra.mxu0 0.0
        %903 = vmatpush.msra.mxu0 0.0
        %904 = vmatpush.msra.mxu0 0.0
        %905 = vmatpush.msra.mxu0 0.0
        %906 = vmatpush.msra.mxu0 0.0
        %907 = vmatpush.msra.mxu0 0.0
        %908 = vmatpush.msra.mxu0 %v896
        %909 = vmatpush.msra.mxu0 %v895
        %910 = vmatpush.msra.mxu0 %v894
        %911 = vmatpush.msra.mxu0 %v893
        %912 = vmatpush.msra.mxu0 %v892
        %913 = vmatpush.msra.mxu0 %v891
        %914 = vmatpush.msra.mxu0 %v890
        %915 = vmatpush.msra.mxu0 %v889
        %916 = vmatmul.f32.gmra.mxu0 %v898
        %v917 = vpop.f32.mrf.mxu0
        %v918 = vadd.f32 0.0, %v917
        %919 = vdwg.mxu0
        %vm920 = vcmask 257024
        %921 = vst.msk [vmem:[%s328] sm:$0xf] %vm920, %v918
        %s922 = sand.u32 %s225, 1
        %s923 = scalar_lea.sflag [#allocation5], %s922
        %s924 = sand.u32 %s225, 1
        %s925 = smul.addr %s924, 4
        %s926 = scalar_lea.vmem [#allocation4], %s925
        // Predicated region
        $region57: #{_lambda_.1} parent=55 // pred_check
          %p927 = pneg %p235
        $region58: #{_lambda_.1} parent=55 // pred_check_branch
          %929 = sbr.rel (%p927) target = $region60
        $region59: #{_lambda_.1} parent=55 // pred_region
          %931 = vsyncadd %s923, 0
          %s932 = smul.addr %s23, 4
          %s933 = scalar_lea.hbm %s9, %s932
          %s935 = sshll.u32 %s926, 4
          %s936 = int_to_ptr.vmem [resolvable:$true] %s935
          %s937 = sshll.u32 %s933, 4
          %s938 = int_to_ptr.hbm [resolvable:$true] %s937
          %940 = dma.vmem_to_hbm [thread:$0]  %s936, 64, %s938, %s923
        $region60: #{_lambda_.1} parent=55 // pred_fallthru
          _
      $region56: #{_lambda_.1} parent=5 // pred_fallthru
        _
      %p941 = scmp.le.s32.totalorder 2, %s18
      // Predicated region
      $region61: #{_lambda_.1} parent=5 // pred_check
        %p942 = pneg %p941
      $region62: #{_lambda_.1} parent=5 // pred_check_branch
        %944 = sbr.rel (%p942) target = $region64
      $region63: #{_lambda_.1} parent=5 // pred_region
        %s945 = ssub.s32 %s18, 2
        // Predicated region
        $region65: #{_lambda_.1} parent=63 // pred_check
          %p946 = pneg %p241
        $region66: #{_lambda_.1} parent=63 // pred_check_branch
          %948 = sbr.rel (%p946) target = $region68
        $region67: #{_lambda_.1} parent=63 // pred_region
          %s949 = sand.u32 %s226, 1
          %s950 = scalar_lea.sflag [#allocation5], %s949
          %s951 = sand.u32 %s226, 1
          %s952 = smul.addr %s951, 4
          %s953 = scalar_lea.vmem [#allocation4], %s952
          %955 = dma.done %s950, 64
        $region68: #{_lambda_.1} parent=63 // pred_fallthru
          _
      $region64: #{_lambda_.1} parent=5 // pred_fallthru
        _
    $region6: #{_lambda_.1} parent=1 // loop_footer
      %s22 = sadd.s32 1, %s18
    $region7: #{_lambda_.1} parent=1 // loop_footer_branch
      %17 = sbr.rel target = $region3
    $region8: #{_lambda_.1} parent=1 // loop_exit
      _
    %956 = vsyncpa [#allocation5], 1
    %s957 = scalar_lea.sflag [#allocation5], 1
    %958 = vsyncpa %s957, 1

</llo_original>
